<compile_context>
chip_gen: v6e
topology: v6e:2x2x1
jax: 0.10.0
libtpu: 0.0.40
codegen_flags: <defaults>
</compile_context>

<pallas_src>
import functools

import jax
import jax.numpy as jnp
from jax.experimental import pallas as pl
from jax.experimental.pallas import tpu as pltpu


_VMEM_TILE_BUDGET = 20 * 1024 * 1024   # budget for double-buffered in+out tiles
_VMEM_LIMIT_BYTES = 32 * 1024 * 1024   # raise v5e's 16 MiB scoped default; == v7x default
_TARGET_ROW_TILE = 512                 # ~85% of HBM roofline per measured tiling sweeps


def _pick_row_tile(rows, features, itemsize, n_streams):
    """Largest row tile (multiple of 16) whose double-buffered tiles fit the budget."""
    if rows <= _TARGET_ROW_TILE:
        # One block covering all rows; block dim == full array dim is always legal.
        return rows
    bytes_per_row = features * itemsize * n_streams * 2   # n_streams tiles, 2x buffered
    max_rows = max(16, _VMEM_TILE_BUDGET // bytes_per_row)
    rt = int(min(_TARGET_ROW_TILE, max_rows))
    rt = max(16, (rt // 16) * 16)   # multiple of 16: native bf16 sublane packing
    return rt


def _layernorm_math(x, a, b, features, eps):
    # x: (TR, F) f32; a, b: (1, F) f32. Reductions are XLU lane reductions (no MXU).
    mean = jnp.mean(x, axis=-1, keepdims=True)
    d = x - mean
    # torch.std default: unbiased (divide by N-1).
    var = jnp.sum(d * d, axis=-1, keepdims=True) * jnp.float32(1.0 / (features - 1))
    # Per-row reciprocal -> EUP slot; hot path is then 3 VALU mul/adds per element.
    inv = pl.reciprocal(jnp.sqrt(var) + jnp.float32(eps), approx=False)
    return d * inv * a + b


def _layernorm_kernel(x_ref, a_ref, b_ref, o_ref, *, features, eps):
    x = x_ref[...].astype(jnp.float32)
    out = _layernorm_math(x, a_ref[...], b_ref[...], features, eps)
    o_ref[...] = out.astype(o_ref.dtype)


def _add_layernorm_kernel(x_ref, r_ref, a_ref, b_ref, y_ref, n_ref, *, features, eps):
    # Fused SublayerConnection step: y = sub_out + residual ; n = LayerNorm(y).
    y = x_ref[...].astype(jnp.float32) + r_ref[...].astype(jnp.float32)
    n = _layernorm_math(y, a_ref[...], b_ref[...], features, eps)
    y_ref[...] = y.astype(y_ref.dtype)
    n_ref[...] = n.astype(n_ref.dtype)


def _flatten(x):
    features = x.shape[-1]
    rows = 1
    for s in x.shape[:-1]:
        rows *= s
    return x.reshape(rows, features), rows, features


def layer_norm(x, a_2, b_2, *, eps=1e-6, row_tile=None):
    """LayerNorm over the last axis of x. x: [..., F]; a_2, b_2: [F]."""
    x2, rows, features = _flatten(x)
    a2 = a_2.reshape(1, features).astype(jnp.float32)
    b2 = b_2.reshape(1, features).astype(jnp.float32)

    rt = row_tile or _pick_row_tile(rows, features, x.dtype.itemsize, n_streams=2)
    grid = (pl.cdiv(rows, rt),)
    kernel = functools.partial(_layernorm_kernel, features=features, eps=eps)

    out = pl.pallas_call(
        kernel,
        out_shape=jax.ShapeDtypeStruct((rows, features), x.dtype),
        grid_spec=pltpu.PrefetchScalarGridSpec(
            num_scalar_prefetch=0,
            grid=grid,
            in_specs=[
                pl.BlockSpec((rt, features), lambda i: (i, 0)),
                pl.BlockSpec((1, features), lambda i: (0, 0)),
                pl.BlockSpec((1, features), lambda i: (0, 0)),
            ],
            out_specs=pl.BlockSpec((rt, features), lambda i: (i, 0)),
        ),
        compiler_params=pltpu.CompilerParams(
            dimension_semantics=("parallel",),
            vmem_limit_bytes=_VMEM_LIMIT_BYTES,
        ),
    )(x2, a2, b2)
    return out.reshape(x.shape)


def add_layer_norm(sub_out, residual, a_2, b_2, *, eps=1e-6, row_tile=None):
    """Fused (residual + sub_out) followed by LayerNorm.

    Returns (y, n) with y = residual + sub_out (new residual stream) and
    n = LayerNorm(y) (input to the next sublayer).
    """
    x2, rows, features = _flatten(sub_out)
    r2, _, _ = _flatten(residual)
    a2 = a_2.reshape(1, features).astype(jnp.float32)
    b2 = b_2.reshape(1, features).astype(jnp.float32)

    rt = row_tile or _pick_row_tile(rows, features, sub_out.dtype.itemsize, n_streams=4)
    grid = (pl.cdiv(rows, rt),)
    kernel = functools.partial(_add_layernorm_kernel, features=features, eps=eps)

    y, n = pl.pallas_call(
        kernel,
        out_shape=(
            jax.ShapeDtypeStruct((rows, features), sub_out.dtype),
            jax.ShapeDtypeStruct((rows, features), sub_out.dtype),
        ),
        grid_spec=pltpu.PrefetchScalarGridSpec(
            num_scalar_prefetch=0,
            grid=grid,
            in_specs=[
                pl.BlockSpec((rt, features), lambda i: (i, 0)),
                pl.BlockSpec((rt, features), lambda i: (i, 0)),
                pl.BlockSpec((1, features), lambda i: (0, 0)),
                pl.BlockSpec((1, features), lambda i: (0, 0)),
            ],
            out_specs=[
                pl.BlockSpec((rt, features), lambda i: (i, 0)),
                pl.BlockSpec((rt, features), lambda i: (i, 0)),
            ],
        ),
        compiler_params=pltpu.CompilerParams(
            dimension_semantics=("parallel",),
            vmem_limit_bytes=_VMEM_LIMIT_BYTES,
        ),
    )(x2, r2, a2, b2)
    return y.reshape(sub_out.shape), n.reshape(sub_out.shape)


if __name__ == "__main__":
    key = jax.random.PRNGKey(0)
    batch, seq, hidden = 2, 8, 32
    kx, kr = jax.random.split(key)

    x = jax.random.normal(kx, (batch, seq, hidden), dtype=jnp.float32)
    sub_out = jax.random.normal(kr, (batch, seq, hidden), dtype=jnp.float32)
    # Parameters exactly as in the module's __init__: ones / zeros.
    a_2 = jnp.ones((hidden,), dtype=jnp.float32)
    b_2 = jnp.zeros((hidden,), dtype=jnp.float32)

    def ref_ln(v):
        mean = jnp.mean(v, axis=-1, keepdims=True)
        std = jnp.sqrt(jnp.sum((v - mean) ** 2, axis=-1, keepdims=True) / (hidden - 1))
        return a_2 * (v - mean) / (std + 1e-6) + b_2

    # Plain LayerNorm (matches the torch module exactly: unbiased std, eps on std).
    y = jax.block_until_ready(layer_norm(x, a_2, b_2, eps=1e-6))
    assert jnp.allclose(y, ref_ln(x), atol=1e-5, rtol=1e-5), "layer_norm mismatch"

    # Fused residual add + LayerNorm (SublayerConnection chaining pattern).
    res, normed = jax.block_until_ready(add_layer_norm(sub_out, x, a_2, b_2, eps=1e-6))
    assert jnp.allclose(res, x + sub_out, atol=1e-5, rtol=1e-5), "residual mismatch"
    assert jnp.allclose(normed, ref_ln(x + sub_out), atol=1e-5, rtol=1e-5), \
        "add_layer_norm mismatch"

    print("KERNEL_OK")
</pallas_src>

<mosaic_0001>
module attributes {stable_mosaic.version = 11 : i64} {
  func.func @_layernorm_kernel(%arg0: i32, %arg1: memref<16x32xf32, #tpu.memory_space<vmem>>, %arg2: memref<1x32xf32, #tpu.memory_space<vmem>>, %arg3: memref<1x32xf32, #tpu.memory_space<vmem>>, %arg4: memref<16x32xf32, #tpu.memory_space<vmem>>) attributes {dimension_semantics = [#tpu.dimension_semantics<parallel>], iteration_bounds = array<i64: 1>, scalar_prefetch = 0 : i64, scratch_operands = 0 : i64, tpu.core_type = #tpu.core_type<tc>, window_params = [{transform_indices = @transform_0, window_bounds = array<i64: 16, 32>}, {pipeline_mode = #tpu.pipeline_mode<synchronous>, transform_indices = @transform_1, window_bounds = array<i64: 1, 32>}, {pipeline_mode = #tpu.pipeline_mode<synchronous>, transform_indices = @transform_2, window_bounds = array<i64: 1, 32>}, {transform_indices = @transform_3, window_bounds = array<i64: 16, 32>}]} {
    %c0 = arith.constant 0 : index
    %c0_0 = arith.constant 0 : index
    %0 = vector.load %arg1[%c0, %c0_0] : memref<16x32xf32, #tpu.memory_space<vmem>>, vector<16x32xf32>
    %c0_1 = arith.constant 0 : index
    %c0_2 = arith.constant 0 : index
    %1 = vector.load %arg2[%c0_1, %c0_2] : memref<1x32xf32, #tpu.memory_space<vmem>>, vector<1x32xf32>
    %c0_3 = arith.constant 0 : index
    %c0_4 = arith.constant 0 : index
    %2 = vector.load %arg3[%c0_3, %c0_4] : memref<1x32xf32, #tpu.memory_space<vmem>>, vector<1x32xf32>
    %cst = arith.constant dense<0.000000e+00> : vector<16xf32>
    %3 = vector.multi_reduction <add>, %0, %cst [1] : vector<16x32xf32> to vector<16xf32>
    %4 = vector.shape_cast %3 : vector<16xf32> to vector<16x1xf32>
    %cst_5 = arith.constant 3.200000e+01 : f32
    %5 = vector.broadcast %cst_5 : f32 to vector<16x1xf32>
    %6 = arith.divf %4, %5 : vector<16x1xf32>
    %7 = vector.broadcast %6 : vector<16x1xf32> to vector<16x32xf32>
    %8 = arith.subf %0, %7 : vector<16x32xf32>
    %9 = arith.mulf %8, %8 : vector<16x32xf32>
    %cst_6 = arith.constant dense<0.000000e+00> : vector<16xf32>
    %10 = vector.multi_reduction <add>, %9, %cst_6 [1] : vector<16x32xf32> to vector<16xf32>
    %11 = vector.shape_cast %10 : vector<16xf32> to vector<16x1xf32>
    %cst_7 = arith.constant 0.0322580636 : f32
    %12 = vector.broadcast %cst_7 : f32 to vector<16x1xf32>
    %13 = arith.mulf %11, %12 : vector<16x1xf32>
    %14 = math.sqrt %13 : vector<16x1xf32>
    %cst_8 = arith.constant 9.99999997E-7 : f32
    %15 = vector.broadcast %cst_8 : f32 to vector<16x1xf32>
    %16 = arith.addf %14, %15 : vector<16x1xf32>
    %17 = tpu.reciprocal %16 : vector<16x1xf32> -> vector<16x1xf32>
    %18 = vector.broadcast %17 : vector<16x1xf32> to vector<16x32xf32>
    %19 = arith.mulf %8, %18 : vector<16x32xf32>
    %20 = vector.broadcast %1 : vector<1x32xf32> to vector<16x32xf32>
    %21 = arith.mulf %19, %20 : vector<16x32xf32>
    %22 = vector.broadcast %2 : vector<1x32xf32> to vector<16x32xf32>
    %23 = arith.addf %21, %22 : vector<16x32xf32>
    %c0_9 = arith.constant 0 : index
    %c0_10 = arith.constant 0 : index
    %24 = vector.load %arg4[%c0_9, %c0_10] : memref<16x32xf32, #tpu.memory_space<vmem>>, vector<16x32xf32>
    tpu.vector_store %arg4[%c0_9, %c0_10], %23 {strides = array<i32>} : memref<16x32xf32, #tpu.memory_space<vmem>>, vector<16x32xf32>,
    return
  }
  func.func @transform_0(%arg0: i32) -> (i32, i32) {
    %c0_i32 = arith.constant 0 : i32
    %c0_i32_0 = arith.constant 0 : i32
    return %arg0, %c0_i32 : i32, i32
  }
  func.func @transform_1(%arg0: i32) -> (i32, i32) {
    %c0_i32 = arith.constant 0 : i32
    %c0_i32_0 = arith.constant 0 : i32
    %c0_i32_1 = arith.constant 0 : i32
    return %c0_i32, %c0_i32_0 : i32, i32
  }
  func.func @transform_2(%arg0: i32) -> (i32, i32) {
    %c0_i32 = arith.constant 0 : i32
    %c0_i32_0 = arith.constant 0 : i32
    %c0_i32_1 = arith.constant 0 : i32
    return %c0_i32, %c0_i32_0 : i32, i32
  }
  func.func @transform_3(%arg0: i32) -> (i32, i32) {
    %c0_i32 = arith.constant 0 : i32
    %c0_i32_0 = arith.constant 0 : i32
    return %arg0, %c0_i32 : i32, i32
  }
}

</mosaic_0001>

<llo_original>
// kernel: tpu_custom_call.1
$region0: #{tpu_custom_call.1}
  #allocation0 [shape = 'u32[]', space=smem, size = 0x4, offset = 0x4, fixed_abs, tag = 'smem constant byte address 0x4 - core index']
  #allocation1 [shape = 'u32[144,128]{1,0:T(1,128)}', space=vmem, size = 0x12000, scoped, tag = 'internal scratch']
  %s0 = inlined_call_operand.hbm [shape: f32[16,32], index: 0, kind: input, shape index: {}]
  %s1 = inlined_call_operand.vmem [shape: f32[1,32], index: 1, kind: input, shape index: {}]
  %s2 = inlined_call_operand.vmem [shape: f32[1,32], index: 2, kind: input, shape index: {}]
  %s3 = inlined_call_operand.hbm [shape: f32[16,32], index: 3, kind: output, shape index: {}]
  %s4 = sld [smem:[#allocation0]]
  $region26: #{tpu_custom_call.1} parent=0
    _
  %s6 = ssub.s32 1, %s4
  %s7 = scalar_select 0, %s6, %s4
  $region1: #{tpu_custom_call.1} parent=0
    #allocation2 [shape = 'u8[8192]{0}', space=vmem, size = 0x2000, scoped, tag = 'input window, operand 0, single buffered']
    #allocation3 [shape = 's32[1]{0}', space=sflag, size = 0x4, scoped, tag = 'scoped memory for tpu_custom_call.1']
    #allocation4 [shape = 's32[1]{0}', space=sflag, size = 0x4, scoped, tag = 'scoped memory for tpu_custom_call.1']
    #allocation5 [shape = 'u8[8192]{0}', space=vmem, size = 0x2000, scoped, tag = 'output window, operand 0, single buffered']
    %8 = vsyncpa [#allocation3], 0
    %9 = vsyncpa [#allocation4], 0
    // Predicated region
    $region2: #{tpu_custom_call.1} parent=1 // pred_check
      _
    $region3: #{tpu_custom_call.1} parent=1 // pred_check_branch
      %11 = sbr.rel (0) target = $region5
    $region4: #{tpu_custom_call.1} parent=1 // pred_region
      %s13 = ssub.s32 256, 256
      %14 = vsyncadd [#allocation3], %s13
      %s15 = sshll.u32 [#allocation2], 4
      %s16 = int_to_ptr.vmem [resolvable:$true] %s15
      %21 = dma.hbm_to_vmem [thread:$0]  %s0, 256, %s16, [#allocation3], 128, 128, 8
    $region5: #{tpu_custom_call.1} parent=1 // pred_fallthru
      _
    // Predicated region
    $region6: #{tpu_custom_call.1} parent=1 // pred_check
      _
    $region7: #{tpu_custom_call.1} parent=1 // pred_check_branch
      %23 = sbr.rel (0) target = $region9
    $region8: #{tpu_custom_call.1} parent=1 // pred_region
      _
    $region9: #{tpu_custom_call.1} parent=1 // pred_fallthru
      _
    // Predicated region
    $region10: #{tpu_custom_call.1} parent=1 // pred_check
      _
    $region11: #{tpu_custom_call.1} parent=1 // pred_check_branch
      %25 = sbr.rel (0) target = $region13
    $region12: #{tpu_custom_call.1} parent=1 // pred_region
      _
    $region13: #{tpu_custom_call.1} parent=1 // pred_fallthru
      _
    // Predicated region
    $region14: #{tpu_custom_call.1} parent=1 // pred_check
      _
    $region15: #{tpu_custom_call.1} parent=1 // pred_check_branch
      %27 = sbr.rel (0) target = $region17
    $region16: #{tpu_custom_call.1} parent=1 // pred_region
      %28 = dma.done [#allocation3], 256
    $region17: #{tpu_custom_call.1} parent=1 // pred_fallthru
      _
    %v29 = vld [vmem:[#allocation2] sm:$0xff]
    %v30 = vld [vmem:[#allocation2 + $0x8] sm:$0xff]
    %v31 = vld [vmem:[%s1] sm:$0x1]
    %v32 = vld [vmem:[%s2] sm:$0x1]
    %vm33 = vcmask 261120
    %v34 = vsel %vm33, %v29, 0.0
    %35 = vadd.xlane.f32.xlu0 %v34
    %v36 = vpop.xlane.xlu0 %35
    %v37 = vsel %vm33, %v30, 0.0
    %38 = vadd.xlane.f32.xlu0 %v37
    %v39 = vpop.xlane.xlu0 %38
    %v40 = vrcp.pop 32.0
    %v41 = vmul.f32 %v36, %v40
    %v42 = vmul.f32 %v39, %v40
    %v43 = vsub.f32 %v29, %v41
    %v44 = vsub.f32 %v30, %v42
    %v45 = vmul.f32 %v43, %v43
    %v46 = vmul.f32 %v44, %v44
    %v47 = vsel %vm33, %v45, 0.0
    %48 = vadd.xlane.f32.xlu0 %v47
    %v49 = vpop.xlane.xlu0 %48
    %v50 = vsel %vm33, %v46, 0.0
    %51 = vadd.xlane.f32.xlu0 %v50
    %v52 = vpop.xlane.xlu0 %51
    %v53 = vmul.f32 %v49, 0.032258064
    %v54 = vmul.f32 %v52, 0.032258064
    %v55 = vrsqrt.pop %v53
    %v56 = vmul.f32 %v53, %v55
    %vm57 = vcmp.eq.f32.partialorder %v53, inf
    %v58 = vsel %vm57, %v53, %v56
    %vm59 = vcmp.eq.f32.partialorder %v53, 0.0
    %v60 = vand.u32 %v53, 2147483648
    %v61 = vsel %vm59, %v60, %v58
    %v62 = vrsqrt.pop %v54
    %v63 = vmul.f32 %v54, %v62
    %vm64 = vcmp.eq.f32.partialorder %v54, inf
    %v65 = vsel %vm64, %v54, %v63
    %vm66 = vcmp.eq.f32.partialorder %v54, 0.0
    %v67 = vand.u32 %v54, 2147483648
    %v68 = vsel %vm66, %v67, %v65
    %v69 = vadd.f32 %v61, 1e-06
    %v70 = vadd.f32 %v68, 1e-06
    %v71 = vrcp.pop %v69
    %v72 = vrcp.pop %v70
    %v73 = vmul.f32 %v43, %v71
    %v74 = vmul.f32 %v44, %v72
    %v76 = vlaneseq
    %v77 = vshrl.u32 %v76, 7
    %v78 = vsub.s32 0, %v77
    %v79 = vrot.slane %v31, %v78
    %v81 = vmul.f32 %v73, %v79
    %v82 = vmul.f32 %v74, %v79
    %v84 = vlaneseq
    %v85 = vshrl.u32 %v84, 7
    %v86 = vsub.s32 0, %v85
    %v87 = vrot.slane %v32, %v86
    %v89 = vadd.f32 %v81, %v87
    %v90 = vadd.f32 %v82, %v87
    %91 = vst.msk [vmem:[#allocation5] sm:$0xff] %vm33, %v89
    %92 = vst.msk [vmem:[#allocation5 + $0x8] sm:$0xff] %vm33, %v90
    // Predicated region
    $region18: #{tpu_custom_call.1} parent=1 // pred_check
      _
    $region19: #{tpu_custom_call.1} parent=1 // pred_check_branch
      %94 = sbr.rel (0) target = $region21
    $region20: #{tpu_custom_call.1} parent=1 // pred_region
      %s96 = ssub.s32 256, 256
      %97 = vsyncadd [#allocation4], %s96
      %s98 = sshll.u32 [#allocation5], 4
      %s99 = int_to_ptr.vmem [resolvable:$true] %s98
      %104 = dma.vmem_to_hbm [thread:$0]  %s99, 256, %s3, [#allocation4], 128, 128, 8
    $region21: #{tpu_custom_call.1} parent=1 // pred_fallthru
      _
    // Predicated region
    $region22: #{tpu_custom_call.1} parent=1 // pred_check
      _
    $region23: #{tpu_custom_call.1} parent=1 // pred_check_branch
      %106 = sbr.rel (0) target = $region25
    $region24: #{tpu_custom_call.1} parent=1 // pred_region
      %107 = dma.done [#allocation4], 256
    $region25: #{tpu_custom_call.1} parent=1 // pred_fallthru
      _
    %108 = vsyncpa [#allocation3], 1
    %109 = vsyncpa [#allocation4], 1

</llo_original>
